<compile_context>
chip_gen: v6e
topology: v6e:2x2x1
jax: 0.10.0
libtpu: 0.0.40
codegen_flags: <defaults>
</compile_context>

<pallas_src>
import numpy as np
import jax
import jax.numpy as jnp
from jax import lax
from jax.experimental import pallas as pl
from jax.experimental.pallas import tpu as pltpu


# ----------------------------------------------------------------------------
# Plain-JAX / numpy glue (data movement + constant tables only)
# ----------------------------------------------------------------------------
def _im2col(x_nhwc, kh, kw, stride):
    """x: (B, H, W, C) -> patches (B, OH*OW, kh*kw*C), plus (OH, OW)."""
    B, H, W, C = x_nhwc.shape
    OH = (H - kh) // stride + 1
    OW = (W - kw) // stride + 1
    cols = []
    for i in range(kh):
        for j in range(kw):
            cols.append(x_nhwc[:, i:i + stride * OH:stride,
                                  j:j + stride * OW:stride, :])     # (B, OH, OW, C)
    p = jnp.stack(cols, axis=3)                                     # (B, OH, OW, kh*kw, C)
    return p.reshape(B, OH * OW, kh * kw * C), OH, OW


def _conv_weight_to_matmul(w_oihw):
    """PyTorch (O, I, kh, kw) -> (kh*kw*I, O), matching _im2col's (i, j, c) order."""
    O, I, kh, kw = w_oihw.shape
    return jnp.transpose(w_oihw, (2, 3, 1, 0)).reshape(kh * kw * I, O)


def _conv2_gather_matrix(H1, W1, H2, W2, kh, kw, stride, pad, p2_pad):
    """Constant 0/1 matrix S so that (S @ c1) lays out the conv2 patches:
    row (dij * p2_pad + o) of S @ c1 is the conv1 activation feeding output
    position o at kernel offset dij (zero row where the input is padding)."""
    S = np.zeros((kh * kw * p2_pad, H1 * W1), np.float32)
    for oh in range(H2):
        for ow in range(W2):
            o = oh * W2 + ow
            for di in range(kh):
                for dj in range(kw):
                    ih = stride * oh + di - pad
                    iw = stride * ow + dj - pad
                    if 0 <= ih < H1 and 0 <= iw < W1:
                        S[(di * kw + dj) * p2_pad + o, ih * W1 + iw] = 1.0
    return S


def _pick_batch_tile(B):
    # Fold batch into the matmul M dimension, but keep >= 2 grid steps so the
    # "parallel" grid axis can be sharded across v7x's two TensorCores.
    if B <= 2:
        return 1
    for bt in (8, 4, 2):
        if B % bt == 0 and B // bt >= 2:
            return bt
    return 1


# ----------------------------------------------------------------------------
# Fused Pallas kernel: conv1 + in-register im2col + conv2 + ReLU + std/mean/max
# ----------------------------------------------------------------------------
def _make_fused_kernel(P1, P2, P2_pad, KK2, NF, Bt):
    inv_n = 1.0 / P2
    # torch.std_mean is unbiased (ddof=1); guard the static constant so a
    # degenerate 1-position spatial output does not divide by zero at trace time.
    inv_nm1 = 1.0 / (P2 - 1) if P2 > 1 else 0.0

    def kernel(p_ref, w1_ref, b1_ref, sel_ref, w2_ref, b2_ref, o_ref):
        # conv1 for the whole batch group: one folded (Bt*P1, K1) @ (K1, NF)
        # bf16 MXU matmul, bias + ReLU in f32.
        c1 = jnp.dot(p_ref[...], w1_ref[...], preferred_element_type=jnp.float32)
        c1 = jnp.maximum(c1 + b1_ref[...], 0.0)                     # (Bt*P1, NF) f32

        for b in range(Bt):                                         # static, unrolled
            cb = c1[b * P1:(b + 1) * P1, :].astype(jnp.bfloat16)    # (P1, NF)

            # conv2 im2col entirely in-register: 0/1 gather matmul; rows are
            # grouped by kernel offset (dij) and padded to P2_pad for aligned
            # row slices below.
            r = jnp.dot(sel_ref[...], cb, preferred_element_type=jnp.float32)
            r = r.astype(jnp.bfloat16)                              # (KK2*P2_pad, NF)

            # conv2 = sum over the 9 kernel offsets of small accumulated matmuls.
            acc = jnp.zeros((P2_pad, NF), jnp.float32)
            for dij in range(KK2):
                acc = acc + jnp.dot(r[dij * P2_pad:(dij + 1) * P2_pad, :],
                                    w2_ref[dij * NF:(dij + 1) * NF, :],
                                    preferred_element_type=jnp.float32)
            y = jnp.maximum(acc[0:P2, :] + b2_ref[...], 0.0)        # (P2, NF) f32

            # Spatial statistics (axis 0), written as three rows per batch
            # element instead of a lane-axis concat.
            mean = jnp.sum(y, axis=0, keepdims=True) * inv_n
            d = y - mean
            var = jnp.sum(d * d, axis=0, keepdims=True) * inv_nm1
            std = jnp.sqrt(var)
            mx = jnp.max(y, axis=0, keepdims=True)
            o_ref[b * 3:(b + 1) * 3, :] = jnp.concatenate([std, mean, mx], axis=0)

    return kernel


# ----------------------------------------------------------------------------
# Encoder forward (Pallas)
# ----------------------------------------------------------------------------
@jax.jit
def encoder_forward(x_nchw, w1, b1, w2, b2):
    B, Cin, H, W = x_nchw.shape
    NF = w1.shape[0]
    Bt = _pick_batch_tile(B)
    G = B // Bt

    x = jnp.transpose(x_nchw, (0, 2, 3, 1)).astype(jnp.float32)     # NCHW -> NHWC

    # Stage-1 patch extraction (pure data movement) stays in the wrapper.
    # TODO(synk): build the 7x7 patches in-kernel (DMA of the padded NHWC input)
    # if H/W grow enough for the ~5x im2col read amplification to matter.
    xp = jnp.pad(x, ((0, 0), (1, 1), (1, 1), (0, 0)))
    p1, H1, W1 = _im2col(xp, 7, 7, 2)                               # (B, P1, K1)
    P1, K1 = p1.shape[1], p1.shape[2]

    # conv2 geometry (3x3, stride 2, ZeroPad2d(1)).
    KK2 = 9
    H2 = (H1 + 2 - 3) // 2 + 1
    W2 = (W1 + 2 - 3) // 2 + 1
    P2 = H2 * W2
    P2_pad = -(-P2 // 16) * 16                                      # aligned row blocks

    sel = jnp.asarray(
        _conv2_gather_matrix(H1, W1, H2, W2, 3, 3, 2, 1, P2_pad), jnp.bfloat16)

    # MXU operands in bf16; bias in f32.
    p1f = p1.reshape(G, Bt * P1, K1).astype(jnp.bfloat16)
    w1r = _conv_weight_to_matmul(w1).astype(jnp.bfloat16)           # (K1, NF)
    w2r = _conv_weight_to_matmul(w2).astype(jnp.bfloat16)           # (KK2*NF, NF)
    b1r = b1.reshape(1, NF).astype(jnp.float32)
    b2r = b2.reshape(1, NF).astype(jnp.float32)

    kernel = _make_fused_kernel(P1, P2, P2_pad, KK2, NF, Bt)

    out = pl.pallas_call(
        kernel,
        out_shape=jax.ShapeDtypeStruct((G, Bt * 3, NF), jnp.float32),
        grid_spec=pltpu.PrefetchScalarGridSpec(
            num_scalar_prefetch=0,
            grid=(G,),
            in_specs=[
                pl.BlockSpec((None, Bt * P1, K1), lambda g: (g, 0, 0)),
                pl.BlockSpec((K1, NF), lambda g: (0, 0)),
                pl.BlockSpec((1, NF), lambda g: (0, 0)),
                pl.BlockSpec((KK2 * P2_pad, P1), lambda g: (0, 0)),
                pl.BlockSpec((KK2 * NF, NF), lambda g: (0, 0)),
                pl.BlockSpec((1, NF), lambda g: (0, 0)),
            ],
            out_specs=pl.BlockSpec((None, Bt * 3, NF), lambda g: (g, 0, 0)),
        ),
        compiler_params=pltpu.CompilerParams(dimension_semantics=("parallel",)),
    )(p1f, w1r, b1r, sel, w2r, b2r)

    return out.reshape(B, 3 * NF)                                   # [std | mean | max]


# ----------------------------------------------------------------------------
# Pure-JAX reference (sanity check against the Pallas path)
# ----------------------------------------------------------------------------
def encoder_reference(x_nchw, w1, b1, w2, b2):
    x = jnp.transpose(x_nchw, (0, 2, 3, 1)).astype(jnp.float32)

    def conv_relu(inp, w, b, stride):
        inp = jnp.pad(inp, ((0, 0), (1, 1), (1, 1), (0, 0)))
        y = lax.conv_general_dilated(
            inp, jnp.transpose(w, (2, 3, 1, 0)), (stride, stride), "VALID",
            dimension_numbers=("NHWC", "HWIO", "NHWC"),
            precision=lax.Precision.HIGHEST)
        return jnp.maximum(y + b.reshape(1, 1, 1, -1), 0.0)

    c1 = conv_relu(x, w1, b1, 2)
    c2 = conv_relu(c1, w2, b2, 2)
    mean = jnp.mean(c2, axis=(1, 2))
    std = jnp.std(c2, axis=(1, 2), ddof=1)          # torch.std_mean default: unbiased
    mx = jnp.max(c2, axis=(1, 2))
    return jnp.concatenate([std, mean, mx], axis=1)


# ----------------------------------------------------------------------------
if __name__ == "__main__":
    B, Cin, H, W = 2, 3, 16, 16
    NF = 32

    key = jax.random.PRNGKey(0)
    k1, k2, k3, k4, k5 = jax.random.split(key, 5)
    w1 = jax.random.normal(k1, (NF, Cin, 7, 7), jnp.float32) * 0.05   # conv1 weight (O,I,kh,kw)
    b1 = jax.random.normal(k2, (NF,), jnp.float32) * 0.05
    w2 = jax.random.normal(k3, (NF, NF, 3, 3), jnp.float32) * 0.05    # conv2 weight
    b2 = jax.random.normal(k4, (NF,), jnp.float32) * 0.05
    x = jax.random.normal(k5, (B, Cin, H, W), jnp.float32)

    out = jax.block_until_ready(encoder_forward(x, w1, b1, w2, b2))
    assert out.shape == (B, 3 * NF), out.shape

    ref = jax.block_until_ready(encoder_reference(x, w1, b1, w2, b2))
    # bf16 MXU operands (f32 accumulate) vs an f32 HIGHEST-precision reference.
    np.testing.assert_allclose(np.asarray(out), np.asarray(ref), rtol=3e-2, atol=3e-2)

    print("KERNEL_OK")
</pallas_src>

<mosaic_0001>
module attributes {stable_mosaic.version = 11 : i64} {
  func.func @kernel(%arg0: i32, %arg1: memref<1x36x147xbf16, #tpu.memory_space<vmem>>, %arg2: memref<147x32xbf16, #tpu.memory_space<vmem>>, %arg3: memref<1x32xf32, #tpu.memory_space<vmem>>, %arg4: memref<144x36xbf16, #tpu.memory_space<vmem>>, %arg5: memref<288x32xbf16, #tpu.memory_space<vmem>>, %arg6: memref<1x32xf32, #tpu.memory_space<vmem>>, %arg7: memref<1x3x32xf32, #tpu.memory_space<vmem>>) attributes {dimension_semantics = [#tpu.dimension_semantics<parallel>], iteration_bounds = array<i64: 2>, scalar_prefetch = 0 : i64, scratch_operands = 0 : i64, tpu.core_type = #tpu.core_type<tc>, window_params = [{transform_indices = @transform_0, window_bounds = array<i64: 1, 36, 147>}, {pipeline_mode = #tpu.pipeline_mode<synchronous>, transform_indices = @transform_1, window_bounds = array<i64: 147, 32>}, {pipeline_mode = #tpu.pipeline_mode<synchronous>, transform_indices = @transform_2, window_bounds = array<i64: 1, 32>}, {pipeline_mode = #tpu.pipeline_mode<synchronous>, transform_indices = @transform_3, window_bounds = array<i64: 144, 36>}, {pipeline_mode = #tpu.pipeline_mode<synchronous>, transform_indices = @transform_4, window_bounds = array<i64: 288, 32>}, {pipeline_mode = #tpu.pipeline_mode<synchronous>, transform_indices = @transform_5, window_bounds = array<i64: 1, 32>}, {transform_indices = @transform_6, window_bounds = array<i64: 1, 3, 32>}]} {
    %c0 = arith.constant 0 : index
    %c0_0 = arith.constant 0 : index
    %c0_1 = arith.constant 0 : index
    %0 = vector.load %arg1[%c0, %c0_0, %c0_1] : memref<1x36x147xbf16, #tpu.memory_space<vmem>>, vector<1x36x147xbf16>
    %1 = vector.shape_cast %0 : vector<1x36x147xbf16> to vector<36x147xbf16>
    %c0_2 = arith.constant 0 : index
    %c0_3 = arith.constant 0 : index
    %2 = vector.load %arg2[%c0_2, %c0_3] : memref<147x32xbf16, #tpu.memory_space<vmem>>, vector<147x32xbf16>
    %cst = arith.constant dense<0.000000e+00> : vector<36x32xf32>
    %3 = tpu.matmul %1, %2, %cst {dimension_numbers = #tpu.dot_dimension_numbers<[1], [0], [0], [1], [0, 0, 1, 1], [], []>} : vector<36x147xbf16>, vector<147x32xbf16>, vector<36x32xf32> -> vector<36x32xf32>
    %c0_4 = arith.constant 0 : index
    %c0_5 = arith.constant 0 : index
    %4 = vector.load %arg3[%c0_4, %c0_5] : memref<1x32xf32, #tpu.memory_space<vmem>>, vector<1x32xf32>
    %5 = vector.broadcast %4 : vector<1x32xf32> to vector<36x32xf32>
    %6 = arith.addf %3, %5 : vector<36x32xf32>
    %cst_6 = arith.constant 0.000000e+00 : f32
    %7 = vector.broadcast %cst_6 : f32 to vector<36x32xf32>
    %8 = arith.maximumf %6, %7 : vector<36x32xf32>
    %9 = arith.truncf %8 : vector<36x32xf32> to vector<36x32xbf16>
    %c0_7 = arith.constant 0 : index
    %c0_8 = arith.constant 0 : index
    %10 = vector.load %arg4[%c0_7, %c0_8] : memref<144x36xbf16, #tpu.memory_space<vmem>>, vector<144x36xbf16>
    %cst_9 = arith.constant dense<0.000000e+00> : vector<144x32xf32>
    %11 = tpu.matmul %10, %9, %cst_9 {dimension_numbers = #tpu.dot_dimension_numbers<[1], [0], [0], [1], [0, 0, 1, 1], [], []>} : vector<144x36xbf16>, vector<36x32xbf16>, vector<144x32xf32> -> vector<144x32xf32>
    %12 = arith.truncf %11 : vector<144x32xf32> to vector<144x32xbf16>
    %cst_10 = arith.constant 0.000000e+00 : f32
    %13 = vector.broadcast %cst_10 : f32 to vector<16x32xf32>
    %14 = vector.extract_strided_slice %12 {offsets = [0, 0], sizes = [16, 32], strides = [1, 1]} : vector<144x32xbf16> to vector<16x32xbf16>
    %c0_11 = arith.constant 0 : index
    %c0_12 = arith.constant 0 : index
    %15 = vector.load %arg5[%c0_11, %c0_12] : memref<288x32xbf16, #tpu.memory_space<vmem>>, vector<32x32xbf16>
    %cst_13 = arith.constant dense<0.000000e+00> : vector<16x32xf32>
    %16 = tpu.matmul %14, %15, %cst_13 {dimension_numbers = #tpu.dot_dimension_numbers<[1], [0], [0], [1], [0, 0, 1, 1], [], []>} : vector<16x32xbf16>, vector<32x32xbf16>, vector<16x32xf32> -> vector<16x32xf32>
    %17 = arith.addf %13, %16 : vector<16x32xf32>
    %18 = vector.extract_strided_slice %12 {offsets = [16, 0], sizes = [16, 32], strides = [1, 1]} : vector<144x32xbf16> to vector<16x32xbf16>
    %c32 = arith.constant 32 : index
    %c0_14 = arith.constant 0 : index
    %19 = vector.load %arg5[%c32, %c0_14] : memref<288x32xbf16, #tpu.memory_space<vmem>>, vector<32x32xbf16>
    %cst_15 = arith.constant dense<0.000000e+00> : vector<16x32xf32>
    %20 = tpu.matmul %18, %19, %cst_15 {dimension_numbers = #tpu.dot_dimension_numbers<[1], [0], [0], [1], [0, 0, 1, 1], [], []>} : vector<16x32xbf16>, vector<32x32xbf16>, vector<16x32xf32> -> vector<16x32xf32>
    %21 = arith.addf %17, %20 : vector<16x32xf32>
    %22 = vector.extract_strided_slice %12 {offsets = [32, 0], sizes = [16, 32], strides = [1, 1]} : vector<144x32xbf16> to vector<16x32xbf16>
    %c64 = arith.constant 64 : index
    %c0_16 = arith.constant 0 : index
    %23 = vector.load %arg5[%c64, %c0_16] : memref<288x32xbf16, #tpu.memory_space<vmem>>, vector<32x32xbf16>
    %cst_17 = arith.constant dense<0.000000e+00> : vector<16x32xf32>
    %24 = tpu.matmul %22, %23, %cst_17 {dimension_numbers = #tpu.dot_dimension_numbers<[1], [0], [0], [1], [0, 0, 1, 1], [], []>} : vector<16x32xbf16>, vector<32x32xbf16>, vector<16x32xf32> -> vector<16x32xf32>
    %25 = arith.addf %21, %24 : vector<16x32xf32>
    %26 = vector.extract_strided_slice %12 {offsets = [48, 0], sizes = [16, 32], strides = [1, 1]} : vector<144x32xbf16> to vector<16x32xbf16>
    %c96 = arith.constant 96 : index
    %c0_18 = arith.constant 0 : index
    %27 = vector.load %arg5[%c96, %c0_18] : memref<288x32xbf16, #tpu.memory_space<vmem>>, vector<32x32xbf16>
    %cst_19 = arith.constant dense<0.000000e+00> : vector<16x32xf32>
    %28 = tpu.matmul %26, %27, %cst_19 {dimension_numbers = #tpu.dot_dimension_numbers<[1], [0], [0], [1], [0, 0, 1, 1], [], []>} : vector<16x32xbf16>, vector<32x32xbf16>, vector<16x32xf32> -> vector<16x32xf32>
    %29 = arith.addf %25, %28 : vector<16x32xf32>
    %30 = vector.extract_strided_slice %12 {offsets = [64, 0], sizes = [16, 32], strides = [1, 1]} : vector<144x32xbf16> to vector<16x32xbf16>
    %c128 = arith.constant 128 : index
    %c0_20 = arith.constant 0 : index
    %31 = vector.load %arg5[%c128, %c0_20] : memref<288x32xbf16, #tpu.memory_space<vmem>>, vector<32x32xbf16>
    %cst_21 = arith.constant dense<0.000000e+00> : vector<16x32xf32>
    %32 = tpu.matmul %30, %31, %cst_21 {dimension_numbers = #tpu.dot_dimension_numbers<[1], [0], [0], [1], [0, 0, 1, 1], [], []>} : vector<16x32xbf16>, vector<32x32xbf16>, vector<16x32xf32> -> vector<16x32xf32>
    %33 = arith.addf %29, %32 : vector<16x32xf32>
    %34 = vector.extract_strided_slice %12 {offsets = [80, 0], sizes = [16, 32], strides = [1, 1]} : vector<144x32xbf16> to vector<16x32xbf16>
    %c160 = arith.constant 160 : index
    %c0_22 = arith.constant 0 : index
    %35 = vector.load %arg5[%c160, %c0_22] : memref<288x32xbf16, #tpu.memory_space<vmem>>, vector<32x32xbf16>
    %cst_23 = arith.constant dense<0.000000e+00> : vector<16x32xf32>
    %36 = tpu.matmul %34, %35, %cst_23 {dimension_numbers = #tpu.dot_dimension_numbers<[1], [0], [0], [1], [0, 0, 1, 1], [], []>} : vector<16x32xbf16>, vector<32x32xbf16>, vector<16x32xf32> -> vector<16x32xf32>
    %37 = arith.addf %33, %36 : vector<16x32xf32>
    %38 = vector.extract_strided_slice %12 {offsets = [96, 0], sizes = [16, 32], strides = [1, 1]} : vector<144x32xbf16> to vector<16x32xbf16>
    %c192 = arith.constant 192 : index
    %c0_24 = arith.constant 0 : index
    %39 = vector.load %arg5[%c192, %c0_24] : memref<288x32xbf16, #tpu.memory_space<vmem>>, vector<32x32xbf16>
    %cst_25 = arith.constant dense<0.000000e+00> : vector<16x32xf32>
    %40 = tpu.matmul %38, %39, %cst_25 {dimension_numbers = #tpu.dot_dimension_numbers<[1], [0], [0], [1], [0, 0, 1, 1], [], []>} : vector<16x32xbf16>, vector<32x32xbf16>, vector<16x32xf32> -> vector<16x32xf32>
    %41 = arith.addf %37, %40 : vector<16x32xf32>
    %42 = vector.extract_strided_slice %12 {offsets = [112, 0], sizes = [16, 32], strides = [1, 1]} : vector<144x32xbf16> to vector<16x32xbf16>
    %c224 = arith.constant 224 : index
    %c0_26 = arith.constant 0 : index
    %43 = vector.load %arg5[%c224, %c0_26] : memref<288x32xbf16, #tpu.memory_space<vmem>>, vector<32x32xbf16>
    %cst_27 = arith.constant dense<0.000000e+00> : vector<16x32xf32>
    %44 = tpu.matmul %42, %43, %cst_27 {dimension_numbers = #tpu.dot_dimension_numbers<[1], [0], [0], [1], [0, 0, 1, 1], [], []>} : vector<16x32xbf16>, vector<32x32xbf16>, vector<16x32xf32> -> vector<16x32xf32>
    %45 = arith.addf %41, %44 : vector<16x32xf32>
    %46 = vector.extract_strided_slice %12 {offsets = [128, 0], sizes = [16, 32], strides = [1, 1]} : vector<144x32xbf16> to vector<16x32xbf16>
    %c256 = arith.constant 256 : index
    %c0_28 = arith.constant 0 : index
    %47 = vector.load %arg5[%c256, %c0_28] : memref<288x32xbf16, #tpu.memory_space<vmem>>, vector<32x32xbf16>
    %cst_29 = arith.constant dense<0.000000e+00> : vector<16x32xf32>
    %48 = tpu.matmul %46, %47, %cst_29 {dimension_numbers = #tpu.dot_dimension_numbers<[1], [0], [0], [1], [0, 0, 1, 1], [], []>} : vector<16x32xbf16>, vector<32x32xbf16>, vector<16x32xf32> -> vector<16x32xf32>
    %49 = arith.addf %45, %48 : vector<16x32xf32>
    %50 = vector.extract_strided_slice %49 {offsets = [0, 0], sizes = [9, 32], strides = [1, 1]} : vector<16x32xf32> to vector<9x32xf32>
    %c0_30 = arith.constant 0 : index
    %c0_31 = arith.constant 0 : index
    %51 = vector.load %arg6[%c0_30, %c0_31] : memref<1x32xf32, #tpu.memory_space<vmem>>, vector<1x32xf32>
    %52 = vector.broadcast %51 : vector<1x32xf32> to vector<9x32xf32>
    %53 = arith.addf %50, %52 : vector<9x32xf32>
    %cst_32 = arith.constant 0.000000e+00 : f32
    %54 = vector.broadcast %cst_32 : f32 to vector<9x32xf32>
    %55 = arith.maximumf %53, %54 : vector<9x32xf32>
    %cst_33 = arith.constant dense<0.000000e+00> : vector<32xf32>
    %56 = vector.multi_reduction <add>, %55, %cst_33 [0] : vector<9x32xf32> to vector<32xf32>
    %57 = vector.shape_cast %56 : vector<32xf32> to vector<1x32xf32>
    %cst_34 = arith.constant 0.111111112 : f32
    %58 = vector.broadcast %cst_34 : f32 to vector<1x32xf32>
    %59 = arith.mulf %57, %58 : vector<1x32xf32>
    %60 = vector.broadcast %59 : vector<1x32xf32> to vector<9x32xf32>
    %61 = arith.subf %55, %60 : vector<9x32xf32>
    %62 = arith.mulf %61, %61 : vector<9x32xf32>
    %cst_35 = arith.constant dense<0.000000e+00> : vector<32xf32>
    %63 = vector.multi_reduction <add>, %62, %cst_35 [0] : vector<9x32xf32> to vector<32xf32>
    %64 = vector.shape_cast %63 : vector<32xf32> to vector<1x32xf32>
    %cst_36 = arith.constant 1.250000e-01 : f32
    %65 = vector.broadcast %cst_36 : f32 to vector<1x32xf32>
    %66 = arith.mulf %64, %65 : vector<1x32xf32>
    %67 = math.sqrt %66 : vector<1x32xf32>
    %cst_37 = arith.constant dense<0xFF800000> : vector<32xf32>
    %68 = vector.multi_reduction <maximumf>, %55, %cst_37 [0] : vector<9x32xf32> to vector<32xf32>
    %69 = vector.shape_cast %68 : vector<32xf32> to vector<1x32xf32>
    %70 = tpu.concatenate %67, %59, %69 in 0 : vector<1x32xf32>, vector<1x32xf32>, vector<1x32xf32> -> vector<3x32xf32>
    %c0_38 = arith.constant 0 : index
    %c0_39 = arith.constant 0 : index
    %c0_40 = arith.constant 0 : index
    %71 = vector.load %arg7[%c0_38, %c0_39, %c0_40] : memref<1x3x32xf32, #tpu.memory_space<vmem>>, vector<1x3x32xf32>
    %72 = vector.shape_cast %71 : vector<1x3x32xf32> to vector<3x32xf32>
    %73 = vector.shape_cast %70 : vector<3x32xf32> to vector<1x3x32xf32>
    tpu.vector_store %arg7[%c0_38, %c0_39, %c0_40], %73 {strides = array<i32>} : memref<1x3x32xf32, #tpu.memory_space<vmem>>, vector<1x3x32xf32>,
    return
  }
  func.func @transform_0(%arg0: i32) -> (i32, i32, i32) {
    %c0_i32 = arith.constant 0 : i32
    %c0_i32_0 = arith.constant 0 : i32
    %c0_i32_1 = arith.constant 0 : i32
    return %arg0, %c0_i32, %c0_i32_0 : i32, i32, i32
  }
  func.func @transform_1(%arg0: i32) -> (i32, i32) {
    %c0_i32 = arith.constant 0 : i32
    %c0_i32_0 = arith.constant 0 : i32
    %c0_i32_1 = arith.constant 0 : i32
    return %c0_i32, %c0_i32_0 : i32, i32
  }
  func.func @transform_2(%arg0: i32) -> (i32, i32) {
    %c0_i32 = arith.constant 0 : i32
    %c0_i32_0 = arith.constant 0 : i32
    %c0_i32_1 = arith.constant 0 : i32
    return %c0_i32, %c0_i32_0 : i32, i32
  }
  func.func @transform_3(%arg0: i32) -> (i32, i32) {
    %c0_i32 = arith.constant 0 : i32
    %c0_i32_0 = arith.constant 0 : i32
    %c0_i32_1 = arith.constant 0 : i32
    return %c0_i32, %c0_i32_0 : i32, i32
  }
  func.func @transform_4(%arg0: i32) -> (i32, i32) {
    %c0_i32 = arith.constant 0 : i32
    %c0_i32_0 = arith.constant 0 : i32
    %c0_i32_1 = arith.constant 0 : i32
    return %c0_i32, %c0_i32_0 : i32, i32
  }
  func.func @transform_5(%arg0: i32) -> (i32, i32) {
    %c0_i32 = arith.constant 0 : i32
    %c0_i32_0 = arith.constant 0 : i32
    %c0_i32_1 = arith.constant 0 : i32
    return %c0_i32, %c0_i32_0 : i32, i32
  }
  func.func @transform_6(%arg0: i32) -> (i32, i32, i32) {
    %c0_i32 = arith.constant 0 : i32
    %c0_i32_0 = arith.constant 0 : i32
    %c0_i32_1 = arith.constant 0 : i32
    return %arg0, %c0_i32, %c0_i32_0 : i32, i32, i32
  }
}

</mosaic_0001>

<llo_original>
// kernel: encoder_forward.1
$region0: #{encoder_forward.1}
  #allocation0 [shape = 'u32[]', space=smem, size = 0x4, offset = 0x4, fixed_abs, tag = 'smem constant byte address 0x4 - core index']
  #allocation1 [shape = 'u32[144,128]{1,0:T(1,128)}', space=vmem, size = 0x12000, scoped, tag = 'internal scratch']
  %s0 = inlined_call_operand.vmem [shape: bf16[2,36,147], index: 0, kind: input, shape index: {}]
  %s1 = inlined_call_operand.vmem [shape: bf16[147,32], index: 1, kind: input, shape index: {}]
  %s2 = inlined_call_operand.vmem [shape: f32[1,32], index: 2, kind: input, shape index: {}]
  %s3 = inlined_call_operand.vmem [shape: bf16[144,36], index: 3, kind: input, shape index: {}]
  %s4 = inlined_call_operand.vmem [shape: bf16[288,32], index: 4, kind: input, shape index: {}]
  %s5 = inlined_call_operand.vmem [shape: f32[1,32], index: 5, kind: input, shape index: {}]
  %s6 = inlined_call_operand.vmem [shape: f32[2,3,32], index: 6, kind: output, shape index: {}]
  %s7 = sld [smem:[#allocation0]]
  $region57: #{encoder_forward.1} parent=0
    _
  %s9 = ssub.s32 1, %s7
  %s10 = scalar_select 0, %s9, %s7
  loop: start=0, step=1, limit=4
  $region2: #{encoder_forward.1} parent=0 // loop_pre_header
    _
  $region3: #{encoder_forward.1} parent=0 // loop_header
    %s12 = sphi 0, %s16
    %p13 = scmp.ge.s32.totalorder %s12, 4
    %s22 = sphi 0, %s24
    %s25 = sphi 0, %s22
    %s26 = sphi 0, %s25
    %s42 = sphi 0, %s26
    %s46 = sphi 0, %s46
    %s48 = sphi 0, %s46
    %s49 = sphi 0, %s48
    %s63 = sphi 0, %s49
    %s67 = sphi 0, %s67
    %s69 = sphi 0, %s67
    %s70 = sphi 0, %s69
    %s84 = sphi 0, %s70
    %s88 = sphi 0, %s88
    %s90 = sphi 0, %s88
    %s91 = sphi 0, %s90
    %s105 = sphi 0, %s91
    %s109 = sphi 0, %s109
    %s111 = sphi 0, %s109
    %s112 = sphi 0, %s111
    %s126 = sphi 0, %s112
    %s130 = sphi 0, %s130
    %s132 = sphi 0, %s130
    %s133 = sphi 0, %s132
    %s147 = sphi 0, %s133
    %s153 = sphi 0, %s155
    %s156 = sphi 0, %s153
    %s157 = sphi 0, %s156
    %s173 = sphi 0, %s157
  $region4: #{encoder_forward.1} parent=0 // loop_header_branch
    %15 = sbr.rel (%p13) target = $region8
  $region5: #{encoder_forward.1} parent=0 // loop_body
    %s17 = ssub.s32 %s12, 1
    %s18 = ssub.s32 %s12, 2
    %s19 = sadd.s32 %s12, 1
    %s20 = ssub.s32 %s12, %s19
    %p21 = scmp.eq.s32.totalorder %s20, 0
    %s23 = sadd.s32 %s22, 1
    %s24 = scalar_select %p21, %s22, %s23
    %p27 = pneg %p21
    %p28 = scmp.eq.s32.totalorder %s12, 1
    %p29 = por %p27, %p28
    %p30 = scmp.ne.s32.totalorder %s22, %s25
    %p31 = scmp.eq.s32.totalorder %s12, 0
    %p32 = por %p30, %p31
    %p33 = scmp.ne.s32.totalorder %s22, %s25
    %p34 = scmp.eq.s32.totalorder %s17, 1
    %p35 = por %p33, %p34
    %p36 = scmp.ne.s32.totalorder %s25, %s26
    %p37 = scmp.eq.s32.totalorder %s17, 0
    %p38 = por %p36, %p37
    %p39 = scmp.ne.s32.totalorder %s25, %s26
    %p40 = scmp.eq.s32.totalorder %s18, 1
    %p41 = por %p39, %p40
    %p43 = scmp.ne.s32.totalorder %s26, %s42
    %p44 = scmp.eq.s32.totalorder %s18, 0
    %p45 = por %p43, %p44
    %s47 = sadd.s32 %s46, 1
    %p50 = scmp.eq.s32.totalorder %s12, 1
    %p51 = scmp.ne.s32.totalorder %s46, %s48
    %p52 = scmp.eq.s32.totalorder %s12, 0
    %p53 = por %p51, %p52
    %p54 = scmp.ne.s32.totalorder %s46, %s48
    %p55 = scmp.eq.s32.totalorder %s17, 1
    %p56 = por %p54, %p55
    %p57 = scmp.ne.s32.totalorder %s48, %s49
    %p58 = scmp.eq.s32.totalorder %s17, 0
    %p59 = por %p57, %p58
    %p60 = scmp.ne.s32.totalorder %s48, %s49
    %p61 = scmp.eq.s32.totalorder %s18, 1
    %p62 = por %p60, %p61
    %p64 = scmp.ne.s32.totalorder %s49, %s63
    %p65 = scmp.eq.s32.totalorder %s18, 0
    %p66 = por %p64, %p65
    %s68 = sadd.s32 %s67, 1
    %p71 = scmp.eq.s32.totalorder %s12, 1
    %p72 = scmp.ne.s32.totalorder %s67, %s69
    %p73 = scmp.eq.s32.totalorder %s12, 0
    %p74 = por %p72, %p73
    %p75 = scmp.ne.s32.totalorder %s67, %s69
    %p76 = scmp.eq.s32.totalorder %s17, 1
    %p77 = por %p75, %p76
    %p78 = scmp.ne.s32.totalorder %s69, %s70
    %p79 = scmp.eq.s32.totalorder %s17, 0
    %p80 = por %p78, %p79
    %p81 = scmp.ne.s32.totalorder %s69, %s70
    %p82 = scmp.eq.s32.totalorder %s18, 1
    %p83 = por %p81, %p82
    %p85 = scmp.ne.s32.totalorder %s70, %s84
    %p86 = scmp.eq.s32.totalorder %s18, 0
    %p87 = por %p85, %p86
    %s89 = sadd.s32 %s88, 1
    %p92 = scmp.eq.s32.totalorder %s12, 1
    %p93 = scmp.ne.s32.totalorder %s88, %s90
    %p94 = scmp.eq.s32.totalorder %s12, 0
    %p95 = por %p93, %p94
    %p96 = scmp.ne.s32.totalorder %s88, %s90
    %p97 = scmp.eq.s32.totalorder %s17, 1
    %p98 = por %p96, %p97
    %p99 = scmp.ne.s32.totalorder %s90, %s91
    %p100 = scmp.eq.s32.totalorder %s17, 0
    %p101 = por %p99, %p100
    %p102 = scmp.ne.s32.totalorder %s90, %s91
    %p103 = scmp.eq.s32.totalorder %s18, 1
    %p104 = por %p102, %p103
    %p106 = scmp.ne.s32.totalorder %s91, %s105
    %p107 = scmp.eq.s32.totalorder %s18, 0
    %p108 = por %p106, %p107
    %s110 = sadd.s32 %s109, 1
    %p113 = scmp.eq.s32.totalorder %s12, 1
    %p114 = scmp.ne.s32.totalorder %s109, %s111
    %p115 = scmp.eq.s32.totalorder %s12, 0
    %p116 = por %p114, %p115
    %p117 = scmp.ne.s32.totalorder %s109, %s111
    %p118 = scmp.eq.s32.totalorder %s17, 1
    %p119 = por %p117, %p118
    %p120 = scmp.ne.s32.totalorder %s111, %s112
    %p121 = scmp.eq.s32.totalorder %s17, 0
    %p122 = por %p120, %p121
    %p123 = scmp.ne.s32.totalorder %s111, %s112
    %p124 = scmp.eq.s32.totalorder %s18, 1
    %p125 = por %p123, %p124
    %p127 = scmp.ne.s32.totalorder %s112, %s126
    %p128 = scmp.eq.s32.totalorder %s18, 0
    %p129 = por %p127, %p128
    %s131 = sadd.s32 %s130, 1
    %p134 = scmp.eq.s32.totalorder %s12, 1
    %p135 = scmp.ne.s32.totalorder %s130, %s132
    %p136 = scmp.eq.s32.totalorder %s12, 0
    %p137 = por %p135, %p136
    %p138 = scmp.ne.s32.totalorder %s130, %s132
    %p139 = scmp.eq.s32.totalorder %s17, 1
    %p140 = por %p138, %p139
    %p141 = scmp.ne.s32.totalorder %s132, %s133
    %p142 = scmp.eq.s32.totalorder %s17, 0
    %p143 = por %p141, %p142
    %p144 = scmp.ne.s32.totalorder %s132, %s133
    %p145 = scmp.eq.s32.totalorder %s18, 1
    %p146 = por %p144, %p145
    %p148 = scmp.ne.s32.totalorder %s133, %s147
    %p149 = scmp.eq.s32.totalorder %s18, 0
    %p150 = por %p148, %p149
    %s151 = ssub.s32 %s12, %s19
    %p152 = scmp.eq.s32.totalorder %s151, 0
    %s154 = sadd.s32 %s153, 1
    %s155 = scalar_select %p152, %s153, %s154
    %p158 = pneg %p152
    %p159 = scmp.eq.s32.totalorder %s12, 1
    %p160 = por %p158, %p159
    %p161 = scmp.ne.s32.totalorder %s153, %s156
    %p162 = scmp.eq.s32.totalorder %s12, 0
    %p163 = por %p161, %p162
    %p164 = scmp.ne.s32.totalorder %s153, %s156
    %p165 = scmp.eq.s32.totalorder %s17, 1
    %p166 = por %p164, %p165
    %p167 = scmp.ne.s32.totalorder %s156, %s157
    %p168 = scmp.eq.s32.totalorder %s17, 0
    %p169 = por %p167, %p168
    %p170 = scmp.ne.s32.totalorder %s156, %s157
    %p171 = scmp.eq.s32.totalorder %s18, 1
    %p172 = por %p170, %p171
    %p174 = scmp.ne.s32.totalorder %s157, %s173
    %p175 = scmp.eq.s32.totalorder %s18, 0
    %p176 = por %p174, %p175
    %p177 = scmp.le.s32.totalorder 1, %s12
    %p178 = scmp.lt.s32.totalorder %s12, 3
    %p179 = pnand %p177, %p178
    %p180 = pneg %p179
    // Predicated region
    $region9: #{encoder_forward.1} parent=5 // pred_check
      _
    $region10: #{encoder_forward.1} parent=5 // pred_check_branch
      %182 = sbr.rel (%p179) target = $region12
    $region11: #{encoder_forward.1} parent=5 // pred_region
      %s183 = ssub.s32 %s12, 1
      // Predicated region
      $region13: #{encoder_forward.1} parent=11 // pred_check
        %p184 = pneg %p59
      $region14: #{encoder_forward.1} parent=11 // pred_check_branch
        %186 = sbr.rel (%p184) target = $region16
      $region15: #{encoder_forward.1} parent=11 // pred_region
        _
      $region16: #{encoder_forward.1} parent=11 // pred_fallthru
        _
      // Predicated region
      $region17: #{encoder_forward.1} parent=11 // pred_check
        %p187 = pneg %p80
      $region18: #{encoder_forward.1} parent=11 // pred_check_branch
        %189 = sbr.rel (%p187) target = $region20
      $region19: #{encoder_forward.1} parent=11 // pred_region
        _
      $region20: #{encoder_forward.1} parent=11 // pred_fallthru
        _
      // Predicated region
      $region21: #{encoder_forward.1} parent=11 // pred_check
        %p190 = pneg %p101
      $region22: #{encoder_forward.1} parent=11 // pred_check_branch
        %192 = sbr.rel (%p190) target = $region24
      $region23: #{encoder_forward.1} parent=11 // pred_region
        _
      $region24: #{encoder_forward.1} parent=11 // pred_fallthru
        _
      // Predicated region
      $region25: #{encoder_forward.1} parent=11 // pred_check
        %p193 = pneg %p122
      $region26: #{encoder_forward.1} parent=11 // pred_check_branch
        %195 = sbr.rel (%p193) target = $region28
      $region27: #{encoder_forward.1} parent=11 // pred_region
        _
      $region28: #{encoder_forward.1} parent=11 // pred_fallthru
        _
      // Predicated region
      $region29: #{encoder_forward.1} parent=11 // pred_check
        %p196 = pneg %p143
      $region30: #{encoder_forward.1} parent=11 // pred_check_branch
        %198 = sbr.rel (%p196) target = $region32
      $region31: #{encoder_forward.1} parent=11 // pred_region
        _
      $region32: #{encoder_forward.1} parent=11 // pred_fallthru
        _
    $region12: #{encoder_forward.1} parent=5 // pred_fallthru
      _
    %p199 = scmp.lt.s32.totalorder %s12, 2
    // Predicated region
    $region33: #{encoder_forward.1} parent=5 // pred_check
      %p200 = pneg %p199
    $region34: #{encoder_forward.1} parent=5 // pred_check_branch
      %202 = sbr.rel (%p200) target = $region36
    $region35: #{encoder_forward.1} parent=5 // pred_region
      // Predicated region
      $region37: #{encoder_forward.1} parent=35 // pred_check
        %p203 = pneg %p32
      $region38: #{encoder_forward.1} parent=35 // pred_check_branch
        %205 = sbr.rel (%p203) target = $region40
      $region39: #{encoder_forward.1} parent=35 // pred_region
        %p206 = scmp.lt.s32.totalorder %s12, 1
        %s207 = scalar_select %p206, %s12, 1
        %s208 = smul.addr %s207, 10
        %s209 = smul.addr %s208, 4
        %s210 = scalar_lea.vmem %s0, %s209
      $region40: #{encoder_forward.1} parent=35 // pred_fallthru
        _
    $region36: #{encoder_forward.1} parent=5 // pred_fallthru
      _
    %p211 = scmp.le.s32.totalorder 1, %s12
    %p212 = scmp.lt.s32.totalorder %s12, 3
    %p213 = pnand %p211, %p212
    %p214 = pneg %p213
    // Predicated region
    $region41: #{encoder_forward.1} parent=5 // pred_check
      _
    $region42: #{encoder_forward.1} parent=5 // pred_check_branch
      %216 = sbr.rel (%p213) target = $region44
    $region43: #{encoder_forward.1} parent=5 // pred_region
      %s217 = ssub.s32 %s12, 1
      %p218 = scmp.lt.s32.totalorder %s17, 1
      %s219 = scalar_select %p218, %s17, 1
      %s220 = smul.addr %s219, 10
      %s221 = smul.addr %s220, 4
      %s222 = scalar_lea.vmem %s0, %s221
      %p223 = pneg %p38
      %p224 = pneg %p35
      %p225 = pneg %p59
      %p226 = pneg %p56
      %p227 = pneg %p80
      %p228 = pneg %p77
      %p229 = pneg %p101
      %p230 = pneg %p98
      %p231 = pneg %p122
      %p232 = pneg %p119
      %p233 = pneg %p143
      %p234 = pneg %p140
      %p235 = pneg %p169
      %p236 = pneg %p166
      %p237 = scmp.lt.s32.totalorder %s17, 1
      %s238 = scalar_select %p237, %s17, 1
      %s239 = smul.addr %s238, 4
      %s240 = scalar_lea.vmem %s6, %s239
      %p241 = scmp.lt.s32.totalorder %s17, 1
      %s242 = scalar_select %p241, %s17, 1
      %s243 = smul.addr %s242, 10
      %s244 = smul.addr %s243, 4
      %s245 = scalar_lea.vmem %s0, %s244
      %p246 = scmp.lt.s32.totalorder %s17, 1
      %s247 = scalar_select %p246, %s17, 1
      %s248 = smul.addr %s247, 4
      %s249 = scalar_lea.vmem %s6, %s248
      %v251 = vld [vmem:[%s245] sm:$0xff]
      %v252 = vld [vmem:[%s245 + $0x8] sm:$0xff]
      %v253 = vld [vmem:[%s245 + $0x10] sm:$0xff]
      %v254 = vld [vmem:[%s245 + $0x18] sm:$0xff]
      %v255 = vld [vmem:[%s245 + $0x20] sm:$0x33]
      %v256 = vld [vmem:[%s1] sm:$0xf]
      %v257 = vld [vmem:[%s1 + $0x4] sm:$0xf]
      %v258 = vld [vmem:[%s1 + $0x8] sm:$0xf]
      %v259 = vld [vmem:[%s1 + $0xc] sm:$0xf]
      %v260 = vld [vmem:[%s1 + $0x10] sm:$0xf]
      %v261 = vld [vmem:[%s1 + $0x14] sm:$0xf]
      %v262 = vld [vmem:[%s1 + $0x18] sm:$0xf]
      %v263 = vld [vmem:[%s1 + $0x1c] sm:$0xf]
      %v264 = vld [vmem:[%s1 + $0x20] sm:$0xf]
      %v265 = vld [vmem:[%s1 + $0x24] sm:$0xf]
      %v266 = vld [vmem:[%s1 + $0x28] sm:$0xf]
      %v267 = vld [vmem:[%s1 + $0x2c] sm:$0xf]
      %v268 = vld [vmem:[%s1 + $0x30] sm:$0xf]
      %v269 = vld [vmem:[%s1 + $0x34] sm:$0xf]
      %v270 = vld [vmem:[%s1 + $0x38] sm:$0xf]
      %v271 = vld [vmem:[%s1 + $0x3c] sm:$0xf]
      %v272 = vld [vmem:[%s1 + $0x40] sm:$0xf]
      %v273 = vld [vmem:[%s1 + $0x44] sm:$0xf]
      %v274 = vld [vmem:[%s1 + $0x48] sm:$0x3]
      %v275 = vld [vmem:[%s2] sm:$0x1]
      %v277 = vlaneseq
      %v278 = vshrl.u32 %v277, 7
      %v279 = vsub.s32 0, %v278
      %v280 = vrot.slane %v275, %v279
      %v287 = vunpack.c.l.b16 %v251
      %v288 = vunpack.c.h.b16 %v251
      %v289 = vunpack.c.l.b16 %v252
      %v290 = vunpack.c.h.b16 %v252
      %v291 = vunpack.c.l.b16 %v253
      %v292 = vunpack.c.h.b16 %v253
      %v293 = vunpack.c.l.b16 %v254
      %v294 = vunpack.c.h.b16 %v254
      %v295 = vunpack.c.l.b16 %v255
      %v296 = vunpack.c.h.b16 %v255
      %v297 = vpack.c.b16 %v289, %v287
      %v298 = vpack.c.b16 %v290, %v288
      %v299 = vpack.c.b16 %v293, %v291
      %v300 = vpack.c.b16 %v294, %v292
      %v301 = vpack.c.b16 %v295, %v295
      %v302 = vpack.c.b16 %v296, %v296
      %v325 = vunpack.c.l.b16 %v256
      %v326 = vunpack.c.l.b16 %v257
      %v327 = vunpack.c.l.b16 %v258
      %v328 = vunpack.c.l.b16 %v259
      %v329 = vunpack.c.l.b16 %v260
      %v330 = vunpack.c.l.b16 %v261
      %v331 = vunpack.c.l.b16 %v262
      %v332 = vunpack.c.l.b16 %v263
      %v333 = vunpack.c.l.b16 %v264
      %v334 = vunpack.c.l.b16 %v265
      %v335 = vunpack.c.l.b16 %v266
      %v336 = vunpack.c.l.b16 %v267
      %v337 = vunpack.c.l.b16 %v268
      %v338 = vunpack.c.l.b16 %v269
      %v339 = vunpack.c.l.b16 %v270
      %v340 = vunpack.c.l.b16 %v271
      %v341 = vunpack.c.l.b16 %v272
      %v342 = vunpack.c.l.b16 %v273
      %v343 = vunpack.c.l.b16 %v274
      %v344 = vpack.c.b16 %v326, %v325
      %v345 = vpack.c.b16 %v328, %v327
      %v346 = vpack.c.b16 %v330, %v329
      %v347 = vpack.c.b16 %v332, %v331
      %v348 = vpack.c.b16 %v334, %v333
      %v349 = vpack.c.b16 %v336, %v335
      %v350 = vpack.c.b16 %v338, %v337
      %v351 = vpack.c.b16 %v340, %v339
      %v352 = vpack.c.b16 %v342, %v341
      %v353 = vpack.c.b16 %v343, %v343
      %vm363 = vcmask 154624
      %v365 = vsel %vm363, %v298, 0
      %v368 = vsel %vm363, %v300, 0
      %v371 = vsel %vm363, %v302, 0
      %vm373 = vcmask 1040384
      %vm374 = vcmask 1041408
      %v375 = vsel %vm373, 4294967295, 65535
      %v376 = vsel %vm374, %v375, 0
      %v378 = vand.u32 %v353, %v376
      %380 = vmatprep.subr.bf16.mxu0 0
      %381 = vmatpush1.bf16.msra.mxu0 %v351
      %382 = vmatprep.subr.bf16.mxu0 0
      %383 = vmatpush1.bf16.msra.mxu0 %v350
      %384 = vmatprep.subr.bf16.mxu0 0
      %385 = vmatpush1.bf16.msra.mxu0 %v349
      %386 = vmatprep.subr.bf16.mxu0 0
      %387 = vmatpush1.bf16.msra.mxu0 %v348
      %388 = vmatprep.subr.bf16.mxu0 0
      %389 = vmatpush1.bf16.msra.mxu0 %v347
      %390 = vmatprep.subr.bf16.mxu0 0
      %391 = vmatpush1.bf16.msra.mxu0 %v346
      %392 = vmatprep.subr.bf16.mxu0 0
      %393 = vmatpush1.bf16.msra.mxu0 %v345
      %394 = vmatprep.subr.bf16.mxu0 0
      %395 = vmatpush1.bf16.msra.mxu0 %v344
      %396 = vmatprep.subr.bf16.mxu0 0
      %397 = vmatpush2.bf16.msra.mxu0 0
      %398 = vmatprep.subr.bf16.mxu0 0
      %399 = vmatpush2.bf16.msra.mxu0 0
      %400 = vmatprep.subr.bf16.mxu0 0
      %401 = vmatpush2.bf16.msra.mxu0 0
      %402 = vmatprep.subr.bf16.mxu0 0
      %403 = vmatpush2.bf16.msra.mxu0 0
      %404 = vmatprep.subr.bf16.mxu0 0
      %405 = vmatpush2.bf16.msra.mxu0 0
      %406 = vmatprep.subr.bf16.mxu0 0
      %407 = vmatpush2.bf16.msra.mxu0 0
      %408 = vmatprep.subr.bf16.mxu0 0
      %409 = vmatpush2.bf16.msra.mxu0 %v378
      %410 = vmatprep.subr.bf16.mxu0 0
      %411 = vmatpush2.bf16.msra.mxu0 %v352
      %412 = vmatprep.mubr.bf16.mxu0 %v365
      %413 = vmatmul.mubr.bf16.gmra.mxu0 %v297
      %v414 = vpop.f32.mrf.mxu0
      %v415 = vadd.f32 %v280, %v414
      %v416 = vpop.f32.mrf.mxu0
      %v417 = vpop.f32.mrf.mxu0
      %v418 = vadd.f32 %v280, %v417
      %v419 = vpop.f32.mrf.mxu0
      %420 = vmatprep.mubr.bf16.mxu0 %v368
      %421 = vmatmul.mubr.bf16.gmra.mxu0 %v299
      %v422 = vpop.f32.mrf.mxu0
      %v423 = vadd.f32 %v280, %v422
      %v424 = vpop.f32.mrf.mxu0
      %v425 = vpop.f32.mrf.mxu0
      %v426 = vadd.f32 %v280, %v425
      %v427 = vpop.f32.mrf.mxu0
      %428 = vmatprep.mubr.bf16.mxu0 %v371
      %429 = vmatmul.mubr.bf16.gmra.mxu0 %v301
      %v430 = vpop.f32.mrf.mxu0
      %v431 = vadd.f32 %v280, %v430
      %v432 = vpop.f32.mrf.mxu0
      %v433 = vpop.f32.mrf.mxu0
      %v434 = vpop.f32.mrf.mxu0
      %435 = vdwg.mxu0
      %v436 = vmax.f32 %v415, 0.0
      %v437 = vmax.f32 %v418, 0.0
      %v438 = vmax.f32 %v423, 0.0
      %v439 = vmax.f32 %v426, 0.0
      %v440 = vmax.f32 %v431, 0.0
      %v441 = vpack.c.bf16 %v437, %v436
      %v442 = vpack.c.bf16 %v439, %v438
      %v443 = vpack.c.bf16 %v440, %v440
      %v444 = vld [vmem:[%s3] sm:$0xf]
      %v445 = vld [vmem:[%s3 + $0x4] sm:$0xf]
      %v446 = vld [vmem:[%s3 + $0x8] sm:$0xf]
      %v447 = vld [vmem:[%s3 + $0xc] sm:$0xf]
      %v448 = vld [vmem:[%s3 + $0x10] sm:$0xf]
      %v449 = vld [vmem:[%s3 + $0x14] sm:$0xf]
      %v450 = vld [vmem:[%s3 + $0x18] sm:$0xf]
      %v451 = vld [vmem:[%s3 + $0x1c] sm:$0xf]
      %v452 = vld [vmem:[%s3 + $0x20] sm:$0xf]
      %v453 = vld [vmem:[%s3 + $0x24] sm:$0xf]
      %v454 = vld [vmem:[%s3 + $0x28] sm:$0xf]
      %v455 = vld [vmem:[%s3 + $0x2c] sm:$0xf]
      %v456 = vld [vmem:[%s3 + $0x30] sm:$0xf]
      %v457 = vld [vmem:[%s3 + $0x34] sm:$0xf]
      %v458 = vld [vmem:[%s3 + $0x38] sm:$0xf]
      %v459 = vld [vmem:[%s3 + $0x3c] sm:$0xf]
      %v460 = vld [vmem:[%s3 + $0x40] sm:$0xf]
      %v461 = vld [vmem:[%s3 + $0x44] sm:$0xf]
      %v480 = vunpack.c.l.b16 %v444
      %v481 = vunpack.c.l.b16 %v445
      %v482 = vunpack.c.l.b16 %v446
      %v483 = vunpack.c.l.b16 %v447
      %v484 = vunpack.c.l.b16 %v448
      %v485 = vunpack.c.l.b16 %v449
      %v486 = vunpack.c.l.b16 %v450
      %v487 = vunpack.c.l.b16 %v451
      %v488 = vunpack.c.l.b16 %v452
      %v489 = vunpack.c.l.b16 %v453
      %v490 = vunpack.c.l.b16 %v454
      %v491 = vunpack.c.l.b16 %v455
      %v492 = vunpack.c.l.b16 %v456
      %v493 = vunpack.c.l.b16 %v457
      %v494 = vunpack.c.l.b16 %v458
      %v495 = vunpack.c.l.b16 %v459
      %v496 = vunpack.c.l.b16 %v460
      %v497 = vunpack.c.l.b16 %v461
      %v498 = vpack.c.b16 %v481, %v480
      %v499 = vpack.c.b16 %v483, %v482
      %v500 = vpack.c.b16 %v485, %v484
      %v501 = vpack.c.b16 %v487, %v486
      %v502 = vpack.c.b16 %v489, %v488
      %v503 = vpack.c.b16 %v491, %v490
      %v504 = vpack.c.b16 %v493, %v492
      %v505 = vpack.c.b16 %v495, %v494
      %v506 = vpack.c.b16 %v497, %v496
      %vm507 = vcmask 293888
      %v509 = vsel %vm507, %v498, 0
      %v512 = vsel %vm507, %v499, 0
      %v515 = vsel %vm507, %v500, 0
      %v518 = vsel %vm507, %v501, 0
      %v521 = vsel %vm507, %v502, 0
      %v524 = vsel %vm507, %v503, 0
      %v527 = vsel %vm507, %v504, 0
      %v530 = vsel %vm507, %v505, 0
      %v533 = vsel %vm507, %v506, 0
      %v536 = vsel %vm374, %v443, 0
      %538 = vmatprep.subr.bf16.mxu0 0
      %539 = vmatpush1.bf16.msra.mxu0 0
      %540 = vmatprep.subr.bf16.mxu0 0
      %541 = vmatpush1.bf16.msra.mxu0 0
      %542 = vmatprep.subr.bf16.mxu0 0
      %543 = vmatpush1.bf16.msra.mxu0 0
      %544 = vmatprep.subr.bf16.mxu0 0
      %545 = vmatpush1.bf16.msra.mxu0 0
      %546 = vmatprep.subr.bf16.mxu0 0
      %547 = vmatpush1.bf16.msra.mxu0 0
      %548 = vmatprep.subr.bf16.mxu0 0
      %549 = vmatpush1.bf16.msra.mxu0 %v536
      %550 = vmatprep.subr.bf16.mxu0 0
      %551 = vmatpush1.bf16.msra.mxu0 %v442
      %552 = vmatprep.subr.bf16.mxu0 0
      %553 = vmatpush1.bf16.msra.mxu0 %v441
      %554 = vmatprep.subr.bf16.mxu0 0
      %555 = vmatpush2.bf16.msra.mxu0 0
      %556 = vmatprep.subr.bf16.mxu0 0
      %557 = vmatpush2.bf16.msra.mxu0 0
      %558 = vmatprep.subr.bf16.mxu0 0
      %559 = vmatpush2.bf16.msra.mxu0 0
      %560 = vmatprep.subr.bf16.mxu0 0
      %561 = vmatpush2.bf16.msra.mxu0 0
      %562 = vmatprep.subr.bf16.mxu0 0
      %563 = vmatpush2.bf16.msra.mxu0 0
      %564 = vmatprep.subr.bf16.mxu0 0
      %565 = vmatpush2.bf16.msra.mxu0 0
      %566 = vmatprep.subr.bf16.mxu0 0
      %567 = vmatpush2.bf16.msra.mxu0 0
      %568 = vmatprep.subr.bf16.mxu0 0
      %569 = vmatpush2.bf16.msra.mxu0 0
      %570 = vmatprep.mubr.bf16.mxu0 0
      %571 = vmatmul.mubr.bf16.gmra.mxu0 %v509
      %v572 = vpop.f32.mrf.mxu0
      %v573 = vadd.f32 0.0, %v572
      %v574 = vpop.f32.mrf.mxu0
      %v575 = vpop.f32.mrf.mxu0
      %v576 = vadd.f32 0.0, %v575
      %v577 = vpop.f32.mrf.mxu0
      %578 = vmatprep.mubr.bf16.mxu0 0
      %579 = vmatmul.mubr.bf16.gmra.mxu0 %v512
      %v580 = vpop.f32.mrf.mxu0
      %v581 = vadd.f32 0.0, %v580
      %v582 = vpop.f32.mrf.mxu0
      %v583 = vpop.f32.mrf.mxu0
      %v584 = vadd.f32 0.0, %v583
      %v585 = vpop.f32.mrf.mxu0
      %586 = vmatprep.mubr.bf16.mxu0 0
      %587 = vmatmul.mubr.bf16.gmra.mxu0 %v515
      %v588 = vpop.f32.mrf.mxu0
      %v589 = vadd.f32 0.0, %v588
      %v590 = vpop.f32.mrf.mxu0
      %v591 = vpop.f32.mrf.mxu0
      %v592 = vadd.f32 0.0, %v591
      %v593 = vpop.f32.mrf.mxu0
      %594 = vmatprep.mubr.bf16.mxu0 0
      %595 = vmatmul.mubr.bf16.gmra.mxu0 %v518
      %v596 = vpop.f32.mrf.mxu0
      %v597 = vadd.f32 0.0, %v596
      %v598 = vpop.f32.mrf.mxu0
      %v599 = vpop.f32.mrf.mxu0
      %v600 = vadd.f32 0.0, %v599
      %v601 = vpop.f32.mrf.mxu0
      %602 = vmatprep.mubr.bf16.mxu0 0
      %603 = vmatmul.mubr.bf16.gmra.mxu0 %v521
      %v604 = vpop.f32.mrf.mxu0
      %v605 = vadd.f32 0.0, %v604
      %v606 = vpop.f32.mrf.mxu0
      %v607 = vpop.f32.mrf.mxu0
      %v608 = vadd.f32 0.0, %v607
      %v609 = vpop.f32.mrf.mxu0
      %610 = vmatprep.mubr.bf16.mxu0 0
      %611 = vmatmul.mubr.bf16.gmra.mxu0 %v524
      %v612 = vpop.f32.mrf.mxu0
      %v613 = vadd.f32 0.0, %v612
      %v614 = vpop.f32.mrf.mxu0
      %v615 = vpop.f32.mrf.mxu0
      %v616 = vadd.f32 0.0, %v615
      %v617 = vpop.f32.mrf.mxu0
      %618 = vmatprep.mubr.bf16.mxu0 0
      %619 = vmatmul.mubr.bf16.gmra.mxu0 %v527
      %v620 = vpop.f32.mrf.mxu0
      %v621 = vadd.f32 0.0, %v620
      %v622 = vpop.f32.mrf.mxu0
      %v623 = vpop.f32.mrf.mxu0
      %v624 = vadd.f32 0.0, %v623
      %v625 = vpop.f32.mrf.mxu0
      %626 = vmatprep.mubr.bf16.mxu0 0
      %627 = vmatmul.mubr.bf16.gmra.mxu0 %v530
      %v628 = vpop.f32.mrf.mxu0
      %v629 = vadd.f32 0.0, %v628
      %v630 = vpop.f32.mrf.mxu0
      %v631 = vpop.f32.mrf.mxu0
      %v632 = vadd.f32 0.0, %v631
      %v633 = vpop.f32.mrf.mxu0
      %634 = vmatprep.mubr.bf16.mxu0 0
      %635 = vmatmul.mubr.bf16.gmra.mxu0 %v533
      %v636 = vpop.f32.mrf.mxu0
      %v637 = vadd.f32 0.0, %v636
      %v638 = vpop.f32.mrf.mxu0
      %v639 = vpop.f32.mrf.mxu0
      %v640 = vadd.f32 0.0, %v639
      %v641 = vpop.f32.mrf.mxu0
      %642 = vdwg.mxu0
      %v643 = vpack.c.bf16 %v576, %v573
      %v644 = vpack.c.bf16 %v584, %v581
      %v645 = vpack.c.bf16 %v592, %v589
      %v646 = vpack.c.bf16 %v600, %v597
      %v647 = vpack.c.bf16 %v608, %v605
      %v648 = vpack.c.bf16 %v616, %v613
      %v649 = vpack.c.bf16 %v624, %v621
      %v650 = vpack.c.bf16 %v632, %v629
      %v651 = vpack.c.bf16 %v640, %v637
      %v652 = vld [vmem:[%s4] sm:$0xf]
      %v653 = vld [vmem:[%s4 + $0x4] sm:$0xf]
      %v654 = vld [vmem:[%s4 + $0x8] sm:$0xf]
      %v655 = vld [vmem:[%s4 + $0xc] sm:$0xf]
      %v656 = vld [vmem:[%s4 + $0x10] sm:$0xf]
      %v657 = vld [vmem:[%s4 + $0x14] sm:$0xf]
      %v658 = vld [vmem:[%s4 + $0x18] sm:$0xf]
      %v659 = vld [vmem:[%s4 + $0x1c] sm:$0xf]
      %v664 = vunpack.c.l.b16 %v656
      %v665 = vunpack.c.l.b16 %v657
      %v666 = vunpack.c.l.b16 %v658
      %v667 = vunpack.c.l.b16 %v659
      %v668 = vpack.c.b16 %v665, %v664
      %v669 = vpack.c.b16 %v667, %v666
      %vm672 = vcmask 261120
      %v674 = vsel %vm672, %v644, 0
      %676 = vmatprep.subr.bf16.mxu0 0
      %677 = vmatpush1.bf16.msra.mxu0 0
      %678 = vmatprep.subr.bf16.mxu0 0
      %679 = vmatpush1.bf16.msra.mxu0 0
      %680 = vmatprep.subr.bf16.mxu0 0
      %681 = vmatpush1.bf16.msra.mxu0 0
      %682 = vmatprep.subr.bf16.mxu0 0
      %683 = vmatpush1.bf16.msra.mxu0 0
      %684 = vmatprep.subr.bf16.mxu0 0
      %685 = vmatpush1.bf16.msra.mxu0 0
      %686 = vmatprep.subr.bf16.mxu0 0
      %687 = vmatpush1.bf16.msra.mxu0 0
      %688 = vmatprep.subr.bf16.mxu0 0
      %689 = vmatpush1.bf16.msra.mxu0 %v669
      %690 = vmatprep.subr.bf16.mxu0 0
      %691 = vmatpush1.bf16.msra.mxu0 %v668
      %692 = vmatprep.subr.bf16.mxu0 0
      %693 = vmatpush2.bf16.msra.mxu0 0
      %694 = vmatprep.subr.bf16.mxu0 0
      %695 = vmatpush2.bf16.msra.mxu0 0
      %696 = vmatprep.subr.bf16.mxu0 0
      %697 = vmatpush2.bf16.msra.mxu0 0
      %698 = vmatprep.subr.bf16.mxu0 0
      %699 = vmatpush2.bf16.msra.mxu0 0
      %700 = vmatprep.subr.bf16.mxu0 0
      %701 = vmatpush2.bf16.msra.mxu0 0
      %702 = vmatprep.subr.bf16.mxu0 0
      %703 = vmatpush2.bf16.msra.mxu0 0
      %704 = vmatprep.subr.bf16.mxu0 0
      %705 = vmatpush2.bf16.msra.mxu0 0
      %706 = vmatprep.subr.bf16.mxu0 0
      %707 = vmatpush2.bf16.msra.mxu0 0
      %708 = vmatprep.mubr.bf16.mxu0 0
      %709 = vmatmul.mubr.bf16.gmra.mxu0 %v674
      %v710 = vpop.f32.mrf.mxu0
      %v711 = vadd.f32 0.0, %v710
      %v712 = vpop.f32.mrf.mxu0
      %v713 = vpop.f32.mrf.mxu0
      %v714 = vadd.f32 0.0, %v713
      %v715 = vpop.f32.mrf.mxu0
      %716 = vdwg.mxu0
      %v721 = vunpack.c.l.b16 %v652
      %v722 = vunpack.c.l.b16 %v653
      %v723 = vunpack.c.l.b16 %v654
      %v724 = vunpack.c.l.b16 %v655
      %v725 = vpack.c.b16 %v722, %v721
      %v726 = vpack.c.b16 %v724, %v723
      %v730 = vsel %vm672, %v643, 0
      %732 = vmatprep.subr.bf16.mxu0 0
      %733 = vmatpush1.bf16.msra.mxu0 0
      %734 = vmatprep.subr.bf16.mxu0 0
      %735 = vmatpush1.bf16.msra.mxu0 0
      %736 = vmatprep.subr.bf16.mxu0 0
      %737 = vmatpush1.bf16.msra.mxu0 0
      %738 = vmatprep.subr.bf16.mxu0 0
      %739 = vmatpush1.bf16.msra.mxu0 0
      %740 = vmatprep.subr.bf16.mxu0 0
      %741 = vmatpush1.bf16.msra.mxu0 0
      %742 = vmatprep.subr.bf16.mxu0 0
      %743 = vmatpush1.bf16.msra.mxu0 0
      %744 = vmatprep.subr.bf16.mxu0 0
      %745 = vmatpush1.bf16.msra.mxu0 %v726
      %746 = vmatprep.subr.bf16.mxu0 0
      %747 = vmatpush1.bf16.msra.mxu0 %v725
      %748 = vmatprep.subr.bf16.mxu0 0
      %749 = vmatpush2.bf16.msra.mxu0 0
      %750 = vmatprep.subr.bf16.mxu0 0
      %751 = vmatpush2.bf16.msra.mxu0 0
      %752 = vmatprep.subr.bf16.mxu0 0
      %753 = vmatpush2.bf16.msra.mxu0 0
      %754 = vmatprep.subr.bf16.mxu0 0
      %755 = vmatpush2.bf16.msra.mxu0 0
      %756 = vmatprep.subr.bf16.mxu0 0
      %757 = vmatpush2.bf16.msra.mxu0 0
      %758 = vmatprep.subr.bf16.mxu0 0
      %759 = vmatpush2.bf16.msra.mxu0 0
      %760 = vmatprep.subr.bf16.mxu0 0
      %761 = vmatpush2.bf16.msra.mxu0 0
      %762 = vmatprep.subr.bf16.mxu0 0
      %763 = vmatpush2.bf16.msra.mxu0 0
      %764 = vmatprep.mubr.bf16.mxu0 0
      %765 = vmatmul.mubr.bf16.gmra.mxu0 %v730
      %v766 = vpop.f32.mrf.mxu0
      %v767 = vadd.f32 %v711, %v766
      %v768 = vpop.f32.mrf.mxu0
      %v769 = vpop.f32.mrf.mxu0
      %v770 = vadd.f32 %v714, %v769
      %v771 = vpop.f32.mrf.mxu0
      %772 = vdwg.mxu0
      %v773 = vld [vmem:[%s4 + $0x20] sm:$0xf]
      %v774 = vld [vmem:[%s4 + $0x24] sm:$0xf]
      %v775 = vld [vmem:[%s4 + $0x28] sm:$0xf]
      %v776 = vld [vmem:[%s4 + $0x2c] sm:$0xf]
      %v781 = vunpack.c.l.b16 %v773
      %v782 = vunpack.c.l.b16 %v774
      %v783 = vunpack.c.l.b16 %v775
      %v784 = vunpack.c.l.b16 %v776
      %v785 = vpack.c.b16 %v782, %v781
      %v786 = vpack.c.b16 %v784, %v783
      %v790 = vsel %vm672, %v645, 0
      %792 = vmatprep.subr.bf16.mxu0 0
      %793 = vmatpush1.bf16.msra.mxu0 0
      %794 = vmatprep.subr.bf16.mxu0 0
      %795 = vmatpush1.bf16.msra.mxu0 0
      %796 = vmatprep.subr.bf16.mxu0 0
      %797 = vmatpush1.bf16.msra.mxu0 0
      %798 = vmatprep.subr.bf16.mxu0 0
      %799 = vmatpush1.bf16.msra.mxu0 0
      %800 = vmatprep.subr.bf16.mxu0 0
      %801 = vmatpush1.bf16.msra.mxu0 0
      %802 = vmatprep.subr.bf16.mxu0 0
      %803 = vmatpush1.bf16.msra.mxu0 0
      %804 = vmatprep.subr.bf16.mxu0 0
      %805 = vmatpush1.bf16.msra.mxu0 %v786
      %806 = vmatprep.subr.bf16.mxu0 0
      %807 = vmatpush1.bf16.msra.mxu0 %v785
      %808 = vmatprep.subr.bf16.mxu0 0
      %809 = vmatpush2.bf16.msra.mxu0 0
      %810 = vmatprep.subr.bf16.mxu0 0
      %811 = vmatpush2.bf16.msra.mxu0 0
      %812 = vmatprep.subr.bf16.mxu0 0
      %813 = vmatpush2.bf16.msra.mxu0 0
      %814 = vmatprep.subr.bf16.mxu0 0
      %815 = vmatpush2.bf16.msra.mxu0 0
      %816 = vmatprep.subr.bf16.mxu0 0
      %817 = vmatpush2.bf16.msra.mxu0 0
      %818 = vmatprep.subr.bf16.mxu0 0
      %819 = vmatpush2.bf16.msra.mxu0 0
      %820 = vmatprep.subr.bf16.mxu0 0
      %821 = vmatpush2.bf16.msra.mxu0 0
      %822 = vmatprep.subr.bf16.mxu0 0
      %823 = vmatpush2.bf16.msra.mxu0 0
      %824 = vmatprep.mubr.bf16.mxu0 0
      %825 = vmatmul.mubr.bf16.gmra.mxu0 %v790
      %v826 = vpop.f32.mrf.mxu0
      %v827 = vadd.f32 0.0, %v826
      %v828 = vpop.f32.mrf.mxu0
      %v829 = vpop.f32.mrf.mxu0
      %v830 = vadd.f32 0.0, %v829
      %v831 = vpop.f32.mrf.mxu0
      %832 = vdwg.mxu0
      %v833 = vadd.f32 %v767, %v827
      %v834 = vadd.f32 %v770, %v830
      %v835 = vld [vmem:[%s4 + $0x30] sm:$0xf]
      %v836 = vld [vmem:[%s4 + $0x34] sm:$0xf]
      %v837 = vld [vmem:[%s4 + $0x38] sm:$0xf]
      %v838 = vld [vmem:[%s4 + $0x3c] sm:$0xf]
      %v843 = vunpack.c.l.b16 %v835
      %v844 = vunpack.c.l.b16 %v836
      %v845 = vunpack.c.l.b16 %v837
      %v846 = vunpack.c.l.b16 %v838
      %v847 = vpack.c.b16 %v844, %v843
      %v848 = vpack.c.b16 %v846, %v845
      %v852 = vsel %vm672, %v646, 0
      %854 = vmatprep.subr.bf16.mxu0 0
      %855 = vmatpush1.bf16.msra.mxu0 0
      %856 = vmatprep.subr.bf16.mxu0 0
      %857 = vmatpush1.bf16.msra.mxu0 0
      %858 = vmatprep.subr.bf16.mxu0 0
      %859 = vmatpush1.bf16.msra.mxu0 0
      %860 = vmatprep.subr.bf16.mxu0 0
      %861 = vmatpush1.bf16.msra.mxu0 0
      %862 = vmatprep.subr.bf16.mxu0 0
      %863 = vmatpush1.bf16.msra.mxu0 0
      %864 = vmatprep.subr.bf16.mxu0 0
      %865 = vmatpush1.bf16.msra.mxu0 0
      %866 = vmatprep.subr.bf16.mxu0 0
      %867 = vmatpush1.bf16.msra.mxu0 %v848
      %868 = vmatprep.subr.bf16.mxu0 0
      %869 = vmatpush1.bf16.msra.mxu0 %v847
      %870 = vmatprep.subr.bf16.mxu0 0
      %871 = vmatpush2.bf16.msra.mxu0 0
      %872 = vmatprep.subr.bf16.mxu0 0
      %873 = vmatpush2.bf16.msra.mxu0 0
      %874 = vmatprep.subr.bf16.mxu0 0
      %875 = vmatpush2.bf16.msra.mxu0 0
      %876 = vmatprep.subr.bf16.mxu0 0
      %877 = vmatpush2.bf16.msra.mxu0 0
      %878 = vmatprep.subr.bf16.mxu0 0
      %879 = vmatpush2.bf16.msra.mxu0 0
      %880 = vmatprep.subr.bf16.mxu0 0
      %881 = vmatpush2.bf16.msra.mxu0 0
      %882 = vmatprep.subr.bf16.mxu0 0
      %883 = vmatpush2.bf16.msra.mxu0 0
      %884 = vmatprep.subr.bf16.mxu0 0
      %885 = vmatpush2.bf16.msra.mxu0 0
      %886 = vmatprep.mubr.bf16.mxu0 0
      %887 = vmatmul.mubr.bf16.gmra.mxu0 %v852
      %v888 = vpop.f32.mrf.mxu0
      %v889 = vadd.f32 0.0, %v888
      %v890 = vpop.f32.mrf.mxu0
      %v891 = vpop.f32.mrf.mxu0
      %v892 = vadd.f32 0.0, %v891
      %v893 = vpop.f32.mrf.mxu0
      %894 = vdwg.mxu0
      %v895 = vadd.f32 %v833, %v889
      %v896 = vadd.f32 %v834, %v892
      %v897 = vld [vmem:[%s4 + $0x40] sm:$0xf]
      %v898 = vld [vmem:[%s4 + $0x44] sm:$0xf]
      %v899 = vld [vmem:[%s4 + $0x48] sm:$0xf]
      %v900 = vld [vmem:[%s4 + $0x4c] sm:$0xf]
      %v905 = vunpack.c.l.b16 %v897
      %v906 = vunpack.c.l.b16 %v898
      %v907 = vunpack.c.l.b16 %v899
      %v908 = vunpack.c.l.b16 %v900
      %v909 = vpack.c.b16 %v906, %v905
      %v910 = vpack.c.b16 %v908, %v907
      %v914 = vsel %vm672, %v647, 0
      %916 = vmatprep.subr.bf16.mxu0 0
      %917 = vmatpush1.bf16.msra.mxu0 0
      %918 = vmatprep.subr.bf16.mxu0 0
      %919 = vmatpush1.bf16.msra.mxu0 0
      %920 = vmatprep.subr.bf16.mxu0 0
      %921 = vmatpush1.bf16.msra.mxu0 0
      %922 = vmatprep.subr.bf16.mxu0 0
      %923 = vmatpush1.bf16.msra.mxu0 0
      %924 = vmatprep.subr.bf16.mxu0 0
      %925 = vmatpush1.bf16.msra.mxu0 0
      %926 = vmatprep.subr.bf16.mxu0 0
      %927 = vmatpush1.bf16.msra.mxu0 0
      %928 = vmatprep.subr.bf16.mxu0 0
      %929 = vmatpush1.bf16.msra.mxu0 %v910
      %930 = vmatprep.subr.bf16.mxu0 0
      %931 = vmatpush1.bf16.msra.mxu0 %v909
      %932 = vmatprep.subr.bf16.mxu0 0
      %933 = vmatpush2.bf16.msra.mxu0 0
      %934 = vmatprep.subr.bf16.mxu0 0
      %935 = vmatpush2.bf16.msra.mxu0 0
      %936 = vmatprep.subr.bf16.mxu0 0
      %937 = vmatpush2.bf16.msra.mxu0 0
      %938 = vmatprep.subr.bf16.mxu0 0
      %939 = vmatpush2.bf16.msra.mxu0 0
      %940 = vmatprep.subr.bf16.mxu0 0
      %941 = vmatpush2.bf16.msra.mxu0 0
      %942 = vmatprep.subr.bf16.mxu0 0
      %943 = vmatpush2.bf16.msra.mxu0 0
      %944 = vmatprep.subr.bf16.mxu0 0
      %945 = vmatpush2.bf16.msra.mxu0 0
      %946 = vmatprep.subr.bf16.mxu0 0
      %947 = vmatpush2.bf16.msra.mxu0 0
      %948 = vmatprep.mubr.bf16.mxu0 0
      %949 = vmatmul.mubr.bf16.gmra.mxu0 %v914
      %v950 = vpop.f32.mrf.mxu0
      %v951 = vadd.f32 0.0, %v950
      %v952 = vpop.f32.mrf.mxu0
      %v953 = vpop.f32.mrf.mxu0
      %v954 = vadd.f32 0.0, %v953
      %v955 = vpop.f32.mrf.mxu0
      %956 = vdwg.mxu0
      %v957 = vadd.f32 %v895, %v951
      %v958 = vadd.f32 %v896, %v954
      %v959 = vld [vmem:[%s4 + $0x50] sm:$0xf]
      %v960 = vld [vmem:[%s4 + $0x54] sm:$0xf]
      %v961 = vld [vmem:[%s4 + $0x58] sm:$0xf]
      %v962 = vld [vmem:[%s4 + $0x5c] sm:$0xf]
      %v967 = vunpack.c.l.b16 %v959
      %v968 = vunpack.c.l.b16 %v960
      %v969 = vunpack.c.l.b16 %v961
      %v970 = vunpack.c.l.b16 %v962
      %v971 = vpack.c.b16 %v968, %v967
      %v972 = vpack.c.b16 %v970, %v969
      %v976 = vsel %vm672, %v648, 0
      %978 = vmatprep.subr.bf16.mxu0 0
      %979 = vmatpush1.bf16.msra.mxu0 0
      %980 = vmatprep.subr.bf16.mxu0 0
      %981 = vmatpush1.bf16.msra.mxu0 0
      %982 = vmatprep.subr.bf16.mxu0 0
      %983 = vmatpush1.bf16.msra.mxu0 0
      %984 = vmatprep.subr.bf16.mxu0 0
      %985 = vmatpush1.bf16.msra.mxu0 0
      %986 = vmatprep.subr.bf16.mxu0 0
      %987 = vmatpush1.bf16.msra.mxu0 0
      %988 = vmatprep.subr.bf16.mxu0 0
      %989 = vmatpush1.bf16.msra.mxu0 0
      %990 = vmatprep.subr.bf16.mxu0 0
      %991 = vmatpush1.bf16.msra.mxu0 %v972
      %992 = vmatprep.subr.bf16.mxu0 0
      %993 = vmatpush1.bf16.msra.mxu0 %v971
      %994 = vmatprep.subr.bf16.mxu0 0
      %995 = vmatpush2.bf16.msra.mxu0 0
      %996 = vmatprep.subr.bf16.mxu0 0
      %997 = vmatpush2.bf16.msra.mxu0 0
      %998 = vmatprep.subr.bf16.mxu0 0
      %999 = vmatpush2.bf16.msra.mxu0 0
      %1000 = vmatprep.subr.bf16.mxu0 0
      %1001 = vmatpush2.bf16.msra.mxu0 0
      %1002 = vmatprep.subr.bf16.mxu0 0
      %1003 = vmatpush2.bf16.msra.mxu0 0
      %1004 = vmatprep.subr.bf16.mxu0 0
      %1005 = vmatpush2.bf16.msra.mxu0 0
      %1006 = vmatprep.subr.bf16.mxu0 0
      %1007 = vmatpush2.bf16.msra.mxu0 0
      %1008 = vmatprep.subr.bf16.mxu0 0
      %1009 = vmatpush2.bf16.msra.mxu0 0
      %1010 = vmatprep.mubr.bf16.mxu0 0
      %1011 = vmatmul.mubr.bf16.gmra.mxu0 %v976
      %v1012 = vpop.f32.mrf.mxu0
      %v1013 = vadd.f32 0.0, %v1012
      %v1014 = vpop.f32.mrf.mxu0
      %v1015 = vpop.f32.mrf.mxu0
      %v1016 = vadd.f32 0.0, %v1015
      %v1017 = vpop.f32.mrf.mxu0
      %1018 = vdwg.mxu0
      %v1019 = vadd.f32 %v957, %v1013
      %v1020 = vadd.f32 %v958, %v1016
      %v1021 = vld [vmem:[%s4 + $0x60] sm:$0xf]
      %v1022 = vld [vmem:[%s4 + $0x64] sm:$0xf]
      %v1023 = vld [vmem:[%s4 + $0x68] sm:$0xf]
      %v1024 = vld [vmem:[%s4 + $0x6c] sm:$0xf]
      %v1029 = vunpack.c.l.b16 %v1021
      %v1030 = vunpack.c.l.b16 %v1022
      %v1031 = vunpack.c.l.b16 %v1023
      %v1032 = vunpack.c.l.b16 %v1024
      %v1033 = vpack.c.b16 %v1030, %v1029
      %v1034 = vpack.c.b16 %v1032, %v1031
      %v1038 = vsel %vm672, %v649, 0
      %1040 = vmatprep.subr.bf16.mxu0 0
      %1041 = vmatpush1.bf16.msra.mxu0 0
      %1042 = vmatprep.subr.bf16.mxu0 0
      %1043 = vmatpush1.bf16.msra.mxu0 0
      %1044 = vmatprep.subr.bf16.mxu0 0
      %1045 = vmatpush1.bf16.msra.mxu0 0
      %1046 = vmatprep.subr.bf16.mxu0 0
      %1047 = vmatpush1.bf16.msra.mxu0 0
      %1048 = vmatprep.subr.bf16.mxu0 0
      %1049 = vmatpush1.bf16.msra.mxu0 0
      %1050 = vmatprep.subr.bf16.mxu0 0
      %1051 = vmatpush1.bf16.msra.mxu0 0
      %1052 = vmatprep.subr.bf16.mxu0 0
      %1053 = vmatpush1.bf16.msra.mxu0 %v1034
      %1054 = vmatprep.subr.bf16.mxu0 0
      %1055 = vmatpush1.bf16.msra.mxu0 %v1033
      %1056 = vmatprep.subr.bf16.mxu0 0
      %1057 = vmatpush2.bf16.msra.mxu0 0
      %1058 = vmatprep.subr.bf16.mxu0 0
      %1059 = vmatpush2.bf16.msra.mxu0 0
      %1060 = vmatprep.subr.bf16.mxu0 0
      %1061 = vmatpush2.bf16.msra.mxu0 0
      %1062 = vmatprep.subr.bf16.mxu0 0
      %1063 = vmatpush2.bf16.msra.mxu0 0
      %1064 = vmatprep.subr.bf16.mxu0 0
      %1065 = vmatpush2.bf16.msra.mxu0 0
      %1066 = vmatprep.subr.bf16.mxu0 0
      %1067 = vmatpush2.bf16.msra.mxu0 0
      %1068 = vmatprep.subr.bf16.mxu0 0
      %1069 = vmatpush2.bf16.msra.mxu0 0
      %1070 = vmatprep.subr.bf16.mxu0 0
      %1071 = vmatpush2.bf16.msra.mxu0 0
      %1072 = vmatprep.mubr.bf16.mxu0 0
      %1073 = vmatmul.mubr.bf16.gmra.mxu0 %v1038
      %v1074 = vpop.f32.mrf.mxu0
      %v1075 = vadd.f32 0.0, %v1074
      %v1076 = vpop.f32.mrf.mxu0
      %v1077 = vpop.f32.mrf.mxu0
      %v1078 = vadd.f32 0.0, %v1077
      %v1079 = vpop.f32.mrf.mxu0
      %1080 = vdwg.mxu0
      %v1081 = vadd.f32 %v1019, %v1075
      %v1082 = vadd.f32 %v1020, %v1078
      %v1083 = vld [vmem:[%s4 + $0x70] sm:$0xf]
      %v1084 = vld [vmem:[%s4 + $0x74] sm:$0xf]
      %v1085 = vld [vmem:[%s4 + $0x78] sm:$0xf]
      %v1086 = vld [vmem:[%s4 + $0x7c] sm:$0xf]
      %v1091 = vunpack.c.l.b16 %v1083
      %v1092 = vunpack.c.l.b16 %v1084
      %v1093 = vunpack.c.l.b16 %v1085
      %v1094 = vunpack.c.l.b16 %v1086
      %v1095 = vpack.c.b16 %v1092, %v1091
      %v1096 = vpack.c.b16 %v1094, %v1093
      %v1100 = vsel %vm672, %v650, 0
      %1102 = vmatprep.subr.bf16.mxu0 0
      %1103 = vmatpush1.bf16.msra.mxu0 0
      %1104 = vmatprep.subr.bf16.mxu0 0
      %1105 = vmatpush1.bf16.msra.mxu0 0
      %1106 = vmatprep.subr.bf16.mxu0 0
      %1107 = vmatpush1.bf16.msra.mxu0 0
      %1108 = vmatprep.subr.bf16.mxu0 0
      %1109 = vmatpush1.bf16.msra.mxu0 0
      %1110 = vmatprep.subr.bf16.mxu0 0
      %1111 = vmatpush1.bf16.msra.mxu0 0
      %1112 = vmatprep.subr.bf16.mxu0 0
      %1113 = vmatpush1.bf16.msra.mxu0 0
      %1114 = vmatprep.subr.bf16.mxu0 0
      %1115 = vmatpush1.bf16.msra.mxu0 %v1096
      %1116 = vmatprep.subr.bf16.mxu0 0
      %1117 = vmatpush1.bf16.msra.mxu0 %v1095
      %1118 = vmatprep.subr.bf16.mxu0 0
      %1119 = vmatpush2.bf16.msra.mxu0 0
      %1120 = vmatprep.subr.bf16.mxu0 0
      %1121 = vmatpush2.bf16.msra.mxu0 0
      %1122 = vmatprep.subr.bf16.mxu0 0
      %1123 = vmatpush2.bf16.msra.mxu0 0
      %1124 = vmatprep.subr.bf16.mxu0 0
      %1125 = vmatpush2.bf16.msra.mxu0 0
      %1126 = vmatprep.subr.bf16.mxu0 0
      %1127 = vmatpush2.bf16.msra.mxu0 0
      %1128 = vmatprep.subr.bf16.mxu0 0
      %1129 = vmatpush2.bf16.msra.mxu0 0
      %1130 = vmatprep.subr.bf16.mxu0 0
      %1131 = vmatpush2.bf16.msra.mxu0 0
      %1132 = vmatprep.subr.bf16.mxu0 0
      %1133 = vmatpush2.bf16.msra.mxu0 0
      %1134 = vmatprep.mubr.bf16.mxu0 0
      %1135 = vmatmul.mubr.bf16.gmra.mxu0 %v1100
      %v1136 = vpop.f32.mrf.mxu0
      %v1137 = vadd.f32 0.0, %v1136
      %v1138 = vpop.f32.mrf.mxu0
      %v1139 = vpop.f32.mrf.mxu0
      %v1140 = vadd.f32 0.0, %v1139
      %v1141 = vpop.f32.mrf.mxu0
      %1142 = vdwg.mxu0
      %v1143 = vadd.f32 %v1081, %v1137
      %v1144 = vadd.f32 %v1082, %v1140
      %v1145 = vld [vmem:[%s4 + $0x80] sm:$0xf]
      %v1146 = vld [vmem:[%s4 + $0x84] sm:$0xf]
      %v1147 = vld [vmem:[%s4 + $0x88] sm:$0xf]
      %v1148 = vld [vmem:[%s4 + $0x8c] sm:$0xf]
      %v1153 = vunpack.c.l.b16 %v1145
      %v1154 = vunpack.c.l.b16 %v1146
      %v1155 = vunpack.c.l.b16 %v1147
      %v1156 = vunpack.c.l.b16 %v1148
      %v1157 = vpack.c.b16 %v1154, %v1153
      %v1158 = vpack.c.b16 %v1156, %v1155
      %v1162 = vsel %vm672, %v651, 0
      %1164 = vmatprep.subr.bf16.mxu0 0
      %1165 = vmatpush1.bf16.msra.mxu0 0
      %1166 = vmatprep.subr.bf16.mxu0 0
      %1167 = vmatpush1.bf16.msra.mxu0 0
      %1168 = vmatprep.subr.bf16.mxu0 0
      %1169 = vmatpush1.bf16.msra.mxu0 0
      %1170 = vmatprep.subr.bf16.mxu0 0
      %1171 = vmatpush1.bf16.msra.mxu0 0
      %1172 = vmatprep.subr.bf16.mxu0 0
      %1173 = vmatpush1.bf16.msra.mxu0 0
      %1174 = vmatprep.subr.bf16.mxu0 0
      %1175 = vmatpush1.bf16.msra.mxu0 0
      %1176 = vmatprep.subr.bf16.mxu0 0
      %1177 = vmatpush1.bf16.msra.mxu0 %v1158
      %1178 = vmatprep.subr.bf16.mxu0 0
      %1179 = vmatpush1.bf16.msra.mxu0 %v1157
      %1180 = vmatprep.subr.bf16.mxu0 0
      %1181 = vmatpush2.bf16.msra.mxu0 0
      %1182 = vmatprep.subr.bf16.mxu0 0
      %1183 = vmatpush2.bf16.msra.mxu0 0
      %1184 = vmatprep.subr.bf16.mxu0 0
      %1185 = vmatpush2.bf16.msra.mxu0 0
      %1186 = vmatprep.subr.bf16.mxu0 0
      %1187 = vmatpush2.bf16.msra.mxu0 0
      %1188 = vmatprep.subr.bf16.mxu0 0
      %1189 = vmatpush2.bf16.msra.mxu0 0
      %1190 = vmatprep.subr.bf16.mxu0 0
      %1191 = vmatpush2.bf16.msra.mxu0 0
      %1192 = vmatprep.subr.bf16.mxu0 0
      %1193 = vmatpush2.bf16.msra.mxu0 0
      %1194 = vmatprep.subr.bf16.mxu0 0
      %1195 = vmatpush2.bf16.msra.mxu0 0
      %1196 = vmatprep.mubr.bf16.mxu0 0
      %1197 = vmatmul.mubr.bf16.gmra.mxu0 %v1162
      %v1198 = vpop.f32.mrf.mxu0
      %v1199 = vadd.f32 0.0, %v1198
      %v1200 = vpop.f32.mrf.mxu0
      %v1201 = vpop.f32.mrf.mxu0
      %v1202 = vadd.f32 0.0, %v1201
      %v1203 = vpop.f32.mrf.mxu0
      %1204 = vdwg.mxu0
      %v1205 = vadd.f32 %v1143, %v1199
      %v1206 = vadd.f32 %v1144, %v1202
      %v1207 = vld [vmem:[%s5] sm:$0x1]
      %v1209 = vlaneseq
      %v1210 = vshrl.u32 %v1209, 7
      %v1211 = vsub.s32 0, %v1210
      %v1212 = vrot.slane %v1207, %v1211
      %v1214 = vadd.f32 %v1205, %v1212
      %v1215 = vadd.f32 %v1206, %v1212
      %v1216 = vmax.f32 %v1214, 0.0
      %v1217 = vmax.f32 %v1215, 0.0
      %v1218 = vsel %vm672, %v1216, 0.0
      %vm1219 = vcmask 253952
      %v1220 = vsel %vm1219, %v1217, 0.0
      %v1221 = vadd.f32 %v1218, %v1220
      %v1222 = vrot.slane %v1221, 4
      %v1223 = vadd.f32 %v1221, %v1222
      %v1224 = vrot.slane %v1223, 2
      %v1225 = vadd.f32 %v1223, %v1224
      %v1226 = vrot.slane %v1225, 1
      %v1227 = vadd.f32 %v1225, %v1226
      %v1228 = vmul.f32 %v1227, 0.11111111
      %v1229 = vsub.f32 %v1216, %v1228
      %v1230 = vsub.f32 %v1217, %v1228
      %v1231 = vmul.f32 %v1229, %v1229
      %v1232 = vmul.f32 %v1230, %v1230
      %v1233 = vsel %vm672, %v1231, 0.0
      %v1234 = vsel %vm1219, %v1232, 0.0
      %v1235 = vadd.f32 %v1233, %v1234
      %v1236 = vrot.slane %v1235, 4
      %v1237 = vadd.f32 %v1235, %v1236
      %v1238 = vrot.slane %v1237, 2
      %v1239 = vadd.f32 %v1237, %v1238
      %v1240 = vrot.slane %v1239, 1
      %v1241 = vadd.f32 %v1239, %v1240
      %v1242 = vmul.f32 %v1241, 0.125
      %v1243 = vrsqrt.pop %v1242
      %v1244 = vmul.f32 %v1242, %v1243
      %vm1245 = vcmp.eq.f32.partialorder %v1242, inf
      %v1246 = vsel %vm1245, %v1242, %v1244
      %vm1247 = vcmp.eq.f32.partialorder %v1242, 0.0
      %v1248 = vand.u32 %v1242, 2147483648
      %v1249 = vsel %vm1247, %v1248, %v1246
      %v1250 = vsel %vm672, %v1216, -inf
      %v1251 = vsel %vm1219, %v1217, -inf
      %v1252 = vmax.f32 %v1250, %v1251
      %v1253 = vrot.slane %v1252, 4
      %v1254 = vmax.f32 %v1252, %v1253
      %v1255 = vrot.slane %v1254, 2
      %v1256 = vmax.f32 %v1254, %v1255
      %v1257 = vrot.slane %v1256, 1
      %v1258 = vmax.f32 %v1256, %v1257
      %v1259 = vsel %vm373, %v1249, %v1228
      %v1260 = vsel %vm374, %v1259, %v1258
      %vm1261 = vcmask 256000
      %1262 = vst.msk [vmem:[%s249] sm:$0x7] %vm1261, %v1260
      %p1263 = scmp.lt.s32.totalorder %s17, 1
      %s1264 = scalar_select %p1263, %s17, 1
      %s1265 = smul.addr %s1264, 4
      %s1266 = scalar_lea.vmem %s6, %s1265
      // Predicated region
      $region45: #{encoder_forward.1} parent=43 // pred_check
        %p1267 = pneg %p166
      $region46: #{encoder_forward.1} parent=43 // pred_check_branch
        %1269 = sbr.rel (%p1267) target = $region48
      $region47: #{encoder_forward.1} parent=43 // pred_region
        _
      $region48: #{encoder_forward.1} parent=43 // pred_fallthru
        _
    $region44: #{encoder_forward.1} parent=5 // pred_fallthru
      _
    %p1270 = scmp.le.s32.totalorder 2, %s12
    // Predicated region
    $region49: #{encoder_forward.1} parent=5 // pred_check
      %p1271 = pneg %p1270
    $region50: #{encoder_forward.1} parent=5 // pred_check_branch
      %1273 = sbr.rel (%p1271) target = $region52
    $region51: #{encoder_forward.1} parent=5 // pred_region
      %s1274 = ssub.s32 %s12, 2
      // Predicated region
      $region53: #{encoder_forward.1} parent=51 // pred_check
        %p1275 = pneg %p172
      $region54: #{encoder_forward.1} parent=51 // pred_check_branch
        %1277 = sbr.rel (%p1275) target = $region56
      $region55: #{encoder_forward.1} parent=51 // pred_region
        %p1278 = scmp.lt.s32.totalorder %s18, 1
        %s1279 = scalar_select %p1278, %s18, 1
        %s1280 = smul.addr %s1279, 4
        %s1281 = scalar_lea.vmem %s6, %s1280
      $region56: #{encoder_forward.1} parent=51 // pred_fallthru
        _
    $region52: #{encoder_forward.1} parent=5 // pred_fallthru
      _
  $region6: #{encoder_forward.1} parent=0 // loop_footer
    %s16 = sadd.s32 1, %s12
  $region7: #{encoder_forward.1} parent=0 // loop_footer_branch
    %11 = sbr.rel target = $region3
  $region8: #{encoder_forward.1} parent=0 // loop_exit
    _

</llo_original>
